<compile_context>
chip_gen: v7x
topology: tpu7x:2x2x1
jax: 0.10.0
libtpu: 0.0.40
codegen_flags: <defaults>
</compile_context>

<pallas_src>
import functools

import jax
import jax.numpy as jnp
from jax import lax
from jax.experimental import pallas as pl
from jax.experimental.pallas import tpu as pltpu


_LANE = 128
_SUBLANE = 8
# Target live working set: double-buffered A/B input tiles + buffered f32
# output tile.  Kept well under 32 MiB scoped VMEM (v6e/v7x default) and far
# under v7x's 64 MiB physical VMEM; v5e's 16 MiB default is raised explicitly.
_VMEM_BUDGET = 24 * 1024 * 1024
_VMEM_LIMIT = 32 * 1024 * 1024


def _round_up(x, m):
    return -(-x // m) * m


def _working_set_bytes(tm, tn, tk):
    # 2x double-buffered a/b tiles + 2x buffered f32 output tile (all f32).
    return 4 * (2 * tm * tk + 2 * tn * tk + 2 * tm * tn)


def _choose_tiling(n, d):
    """Return (tm, tn, tk, n_pad, d_pad, use_k_axis)."""
    d_full = _round_up(d, _LANE)

    if n <= 512:
        # Small-N fast path: one output tile, rows padded only to the sublane.
        tm = tn = _round_up(n, _SUBLANE)
    else:
        # Large N: MXU-sized, lane-dense tiles; prefer whichever pads N least.
        tm = tn = min((512, 256), key=lambda t: (_round_up(n, t), -t))
    n_pad = _round_up(n, tm)

    # Prefer collapsing the contraction axis entirely: the A row tile is then
    # unchanged across the whole j loop, so Pallas skips its re-DMA and input
    # HBM traffic is roughly halved for this mem-bound kernel.
    if _working_set_bytes(tm, tn, d_full) <= _VMEM_BUDGET:
        return tm, tn, d_full, n_pad, d_full, False

    # Otherwise tile K with the largest chunk that fits the VMEM budget.
    tk = _LANE
    for cand in (8192, 4096, 2048, 1024, 512, 256, 128):
        if _working_set_bytes(tm, tn, cand) <= _VMEM_BUDGET:
            tk = cand
            break
    return tm, tn, tk, n_pad, _round_up(d, tk), True


def _int_pow(v, degree):
    # Unrolled multiply chain (degree is a small static Python int).
    if degree == 0:
        return jnp.ones_like(v)
    out = v
    for _ in range(degree - 1):
        out = out * v
    return out


def _poli_kernel_fused(a_ref, b_ref, o_ref, *, constant_term, degree):
    # Whole contraction axis resident in VMEM: single dot + fused epilogue.
    gram = lax.dot_general(
        a_ref[...],
        b_ref[...],
        dimension_numbers=(((1,), (1,)), ((), ())),  # A @ B.T (flash-attn style)
        preferred_element_type=jnp.float32,
    )
    o_ref[...] = _int_pow(gram + jnp.float32(constant_term), degree)


def _poli_kernel_ktiled(a_ref, b_ref, o_ref, *, constant_term, degree):
    # Accumulate straight into the resident f32 output tile (no scratch).
    @pl.when(pl.program_id(2) == 0)
    def _():
        o_ref[...] = jnp.zeros_like(o_ref)

    o_ref[...] += lax.dot_general(
        a_ref[...],
        b_ref[...],
        dimension_numbers=(((1,), (1,)), ((), ())),
        preferred_element_type=jnp.float32,
    )

    @pl.when(pl.program_id(2) == pl.num_programs(2) - 1)
    def _():
        o_ref[...] = _int_pow(o_ref[...] + jnp.float32(constant_term), degree)


def poli_kernel_matrix(x, *, constant_term=1, degree=2):
    """x: (N, ...) array. Returns the (N, N) f32 polynomial kernel matrix."""
    n = x.shape[0]
    x_flat = jnp.reshape(x, (n, -1)).astype(jnp.float32)
    d = x_flat.shape[1]

    tm, tn, tk, n_pad, d_pad, use_k = _choose_tiling(n, d)

    x_p = x_flat
    if (n_pad, d_pad) != (n, d):
        # Zero-padded rows only affect entries cropped below; zero-padded
        # features do not change the dot products.
        x_p = jnp.pad(x_flat, ((0, n_pad - n), (0, d_pad - d)))

    ct = float(constant_term)
    deg = int(degree)

    if use_k:
        kernel = functools.partial(_poli_kernel_ktiled, constant_term=ct, degree=deg)
        grid = (n_pad // tm, n_pad // tn, d_pad // tk)
        in_specs = [
            pl.BlockSpec((tm, tk), lambda i, j, k: (i, k)),  # row tiles
            pl.BlockSpec((tn, tk), lambda i, j, k: (j, k)),  # col tiles
        ]
        out_specs = pl.BlockSpec((tm, tn), lambda i, j, k: (i, j))
        dim_sem = ("parallel", "parallel", "arbitrary")
    else:
        kernel = functools.partial(_poli_kernel_fused, constant_term=ct, degree=deg)
        grid = (n_pad // tm, n_pad // tn)
        in_specs = [
            pl.BlockSpec((tm, d_pad), lambda i, j: (i, 0)),  # row tile, reused over j
            pl.BlockSpec((tn, d_pad), lambda i, j: (j, 0)),  # col tile
        ]
        out_specs = pl.BlockSpec((tm, tn), lambda i, j: (i, j))
        dim_sem = ("parallel", "parallel")

    out_padded = pl.pallas_call(
        kernel,
        out_shape=jax.ShapeDtypeStruct((n_pad, n_pad), jnp.float32),
        grid_spec=pltpu.PrefetchScalarGridSpec(
            num_scalar_prefetch=0,
            grid=grid,
            in_specs=in_specs,
            out_specs=out_specs,
        ),
        compiler_params=pltpu.CompilerParams(
            dimension_semantics=dim_sem,
            vmem_limit_bytes=_VMEM_LIMIT,
        ),
    )(x_p, x_p)

    if n_pad != n:
        return out_padded[:n, :n]
    return out_padded


def _reference(x, constant_term=1, degree=2):
    n = x.shape[0]
    xf = jnp.reshape(x, (n, -1)).astype(jnp.float32)
    gram = jnp.dot(xf, xf.T, precision=lax.Precision.HIGHEST)
    return (gram + jnp.float32(constant_term)) ** degree


if __name__ == "__main__":
    # Deterministic "parameters" from the module's __init__.
    constant_term = 1
    degree = 2

    # Small NCHW input: batch=8, channels=4, spatial=16x16 -> N=8, D=1024.
    key = jax.random.PRNGKey(0)
    x = jax.random.normal(key, (8, 4, 16, 16), dtype=jnp.float32)

    out = jax.block_until_ready(
        poli_kernel_matrix(x, constant_term=constant_term, degree=degree)
    )
    ref = _reference(x, constant_term, degree)
    assert out.shape == (8, 8)
    assert jnp.allclose(out, ref, atol=1e-2, rtol=1e-3), "mismatch vs reference (N=8)"

    # Second shape: non-lane-multiple N / D exercising the pad + single-tile path.
    x2 = jax.random.normal(jax.random.PRNGKey(1), (200, 70), dtype=jnp.float32)
    out2 = jax.block_until_ready(poli_kernel_matrix(x2))
    ref2 = _reference(x2)
    assert out2.shape == (200, 200)
    assert jnp.allclose(out2, ref2, atol=1e-2, rtol=1e-3), "mismatch vs reference (N=200)"

    print("KERNEL_OK")
</pallas_src>

<mosaic_0001>
module attributes {stable_mosaic.version = 11 : i64} {
  func.func @_poli_kernel_fused(%arg0: i32, %arg1: i32, %arg2: memref<8x1024xf32, #tpu.memory_space<vmem>>, %arg3: memref<8x1024xf32, #tpu.memory_space<vmem>>, %arg4: memref<8x8xf32, #tpu.memory_space<vmem>>) attributes {dimension_semantics = [#tpu.dimension_semantics<parallel>, #tpu.dimension_semantics<parallel>], iteration_bounds = array<i64: 1, 1>, scalar_prefetch = 0 : i64, scratch_operands = 0 : i64, tpu.core_type = #tpu.core_type<tc>, window_params = [{transform_indices = @transform_0, window_bounds = array<i64: 8, 1024>}, {transform_indices = @transform_1, window_bounds = array<i64: 8, 1024>}, {transform_indices = @transform_2, window_bounds = array<i64: 8, 8>}]} {
    %c0 = arith.constant 0 : index
    %c0_0 = arith.constant 0 : index
    %0 = vector.load %arg2[%c0, %c0_0] : memref<8x1024xf32, #tpu.memory_space<vmem>>, vector<8x1024xf32>
    %c0_1 = arith.constant 0 : index
    %c0_2 = arith.constant 0 : index
    %1 = vector.load %arg3[%c0_1, %c0_2] : memref<8x1024xf32, #tpu.memory_space<vmem>>, vector<8x1024xf32>
    %cst = arith.constant dense<0.000000e+00> : vector<8x8xf32>
    %2 = tpu.matmul %0, %1, %cst {dimension_numbers = #tpu.dot_dimension_numbers<[1], [1], [0], [0], [0, 0, 1, 0], [], []>} : vector<8x1024xf32>, vector<8x1024xf32>, vector<8x8xf32> -> vector<8x8xf32>
    %cst_3 = arith.constant 1.000000e+00 : f32
    %3 = vector.broadcast %cst_3 : f32 to vector<8x8xf32>
    %4 = arith.addf %2, %3 : vector<8x8xf32>
    %5 = arith.mulf %4, %4 : vector<8x8xf32>
    %c0_4 = arith.constant 0 : index
    %c0_5 = arith.constant 0 : index
    %6 = vector.load %arg4[%c0_4, %c0_5] : memref<8x8xf32, #tpu.memory_space<vmem>>, vector<8x8xf32>
    tpu.vector_store %arg4[%c0_4, %c0_5], %5 {strides = array<i32>} : memref<8x8xf32, #tpu.memory_space<vmem>>, vector<8x8xf32>,
    return
  }
  func.func @transform_0(%arg0: i32, %arg1: i32) -> (i32, i32) {
    %c0_i32 = arith.constant 0 : i32
    %c0_i32_0 = arith.constant 0 : i32
    return %arg0, %c0_i32 : i32, i32
  }
  func.func @transform_1(%arg0: i32, %arg1: i32) -> (i32, i32) {
    %c0_i32 = arith.constant 0 : i32
    %c0_i32_0 = arith.constant 0 : i32
    return %arg1, %c0_i32 : i32, i32
  }
  func.func @transform_2(%arg0: i32, %arg1: i32) -> (i32, i32) {
    %c0_i32 = arith.constant 0 : i32
    return %arg0, %arg1 : i32, i32
  }
}

</mosaic_0001>

<llo_original>
// kernel: tpu_custom_call.1
$region0: #{tpu_custom_call.1}
  #allocation0 [shape = 'u32[]', space=smem, size = 0x4, offset = 0x4, fixed_abs, tag = 'smem constant byte address 0x4 - core index']
  #allocation1 [shape = 'u32[144,128]{1,0:T(1,128)}', space=vmem, size = 0x12000, scoped, tag = 'internal scratch']
  %s0 = inlined_call_operand.hbm [shape: f32[8,1024], index: 0, kind: input, shape index: {}]
  %s1 = inlined_call_operand.hbm [shape: f32[8,1024], index: 1, kind: input, shape index: {}]
  %s2 = inlined_call_operand.hbm [shape: f32[8,8], index: 2, kind: output, shape index: {}]
  %s3 = sld [smem:[#allocation0]]
  $region26: #{tpu_custom_call.1} parent=0
    _
  %s5 = ssub.s32 1, %s3
  %s6 = scalar_select 0, %s5, %s3
  $region1: #{tpu_custom_call.1} parent=0
    #allocation2 [shape = 'u8[32768]{0}', space=vmem, size = 0x8000, scoped, tag = 'input window, operand 0, single buffered']
    #allocation3 [shape = 's32[1]{0}', space=sflag, size = 0x4, scoped, tag = 'scoped memory for tpu_custom_call.1']
    #allocation4 [shape = 's32[1]{0}', space=sflag, size = 0x4, scoped, tag = 'scoped memory for tpu_custom_call.1']
    #allocation5 [shape = 'u8[32768]{0}', space=vmem, size = 0x8000, scoped, tag = 'input window, operand 1, single buffered']
    #allocation6 [shape = 's32[1]{0}', space=sflag, size = 0x4, scoped, tag = 'scoped memory for tpu_custom_call.1']
    #allocation7 [shape = 'u8[4096]{0}', space=vmem, size = 0x1000, scoped, tag = 'output window, operand 0, single buffered']
    %7 = vsyncpa [#allocation3], 0
    %8 = vsyncpa [#allocation6], 0
    %9 = vsyncpa [#allocation4], 0
    // Predicated region
    $region2: #{tpu_custom_call.1} parent=1 // pred_check
      _
    $region3: #{tpu_custom_call.1} parent=1 // pred_check_branch
      %11 = sbr.rel (0) target = $region5
    $region4: #{tpu_custom_call.1} parent=1 // pred_region
      %s13 = ssub.s32 1024, 1024
      %14 = vsyncadd [#allocation3], %s13
      %s16 = sshll.u32 [#allocation2], 4
      %s17 = int_to_ptr.vmem [resolvable:$true] %s16
      %19 = dma.hbm_to_vmem [thread:$0]  %s0, 1024, %s17, [#allocation3]
    $region5: #{tpu_custom_call.1} parent=1 // pred_fallthru
      _
    // Predicated region
    $region6: #{tpu_custom_call.1} parent=1 // pred_check
      _
    $region7: #{tpu_custom_call.1} parent=1 // pred_check_branch
      %21 = sbr.rel (0) target = $region9
    $region8: #{tpu_custom_call.1} parent=1 // pred_region
      %s23 = ssub.s32 1024, 1024
      %24 = vsyncadd [#allocation6], %s23
      %s26 = sshll.u32 [#allocation5], 4
      %s27 = int_to_ptr.vmem [resolvable:$true] %s26
      %29 = dma.hbm_to_vmem [thread:$0]  %s1, 1024, %s27, [#allocation6]
    $region9: #{tpu_custom_call.1} parent=1 // pred_fallthru
      _
    // Predicated region
    $region10: #{tpu_custom_call.1} parent=1 // pred_check
      _
    $region11: #{tpu_custom_call.1} parent=1 // pred_check_branch
      %31 = sbr.rel (0) target = $region13
    $region12: #{tpu_custom_call.1} parent=1 // pred_region
      %32 = dma.done [#allocation3], 1024
    $region13: #{tpu_custom_call.1} parent=1 // pred_fallthru
      _
    // Predicated region
    $region14: #{tpu_custom_call.1} parent=1 // pred_check
      _
    $region15: #{tpu_custom_call.1} parent=1 // pred_check_branch
      %34 = sbr.rel (0) target = $region17
    $region16: #{tpu_custom_call.1} parent=1 // pred_region
      %35 = dma.done [#allocation6], 1024
    $region17: #{tpu_custom_call.1} parent=1 // pred_fallthru
      _
    %v36 = vld [vmem:[#allocation2] sm:$0xff]
    %v37 = vld [vmem:[#allocation2 + $0x8] sm:$0xff]
    %v38 = vld [vmem:[#allocation2 + $0x10] sm:$0xff]
    %v39 = vld [vmem:[#allocation2 + $0x18] sm:$0xff]
    %v40 = vld [vmem:[#allocation2 + $0x20] sm:$0xff]
    %v41 = vld [vmem:[#allocation2 + $0x28] sm:$0xff]
    %v42 = vld [vmem:[#allocation2 + $0x30] sm:$0xff]
    %v43 = vld [vmem:[#allocation2 + $0x38] sm:$0xff]
    %v44 = vld [vmem:[#allocation5] sm:$0xff]
    %v45 = vld [vmem:[#allocation5 + $0x8] sm:$0xff]
    %v46 = vld [vmem:[#allocation5 + $0x10] sm:$0xff]
    %v47 = vld [vmem:[#allocation5 + $0x18] sm:$0xff]
    %v48 = vld [vmem:[#allocation5 + $0x20] sm:$0xff]
    %v49 = vld [vmem:[#allocation5 + $0x28] sm:$0xff]
    %v50 = vld [vmem:[#allocation5 + $0x30] sm:$0xff]
    %v51 = vld [vmem:[#allocation5 + $0x38] sm:$0xff]
    %52 = vmatprep.subr.mxu0 %v45
    %53 = vmatpush1.xpose.msra.mxu0 %v44
    %54 = vmatprep.subr.mxu0 0.0
    %55 = vmatpush1.xpose.msra.mxu0 0.0
    %56 = vmatprep.subr.mxu0 0.0
    %57 = vmatpush1.xpose.msra.mxu0 0.0
    %58 = vmatprep.subr.mxu0 0.0
    %59 = vmatpush1.xpose.msra.mxu0 0.0
    %60 = vmatprep.subr.mxu0 0.0
    %61 = vmatpush1.xpose.msra.mxu0 0.0
    %62 = vmatprep.subr.mxu0 0.0
    %63 = vmatpush1.xpose.msra.mxu0 0.0
    %64 = vmatprep.subr.mxu0 0.0
    %65 = vmatpush1.xpose.msra.mxu0 0.0
    %66 = vmatprep.subr.mxu0 0.0
    %67 = vmatpush1.xpose.msra.mxu0 0.0
    %68 = vmatprep.subr.mxu0 0.0
    %69 = vmatpush1.xpose.msra.mxu0 0.0
    %70 = vmatprep.subr.mxu0 0.0
    %71 = vmatpush1.xpose.msra.mxu0 0.0
    %72 = vmatprep.subr.mxu0 0.0
    %73 = vmatpush1.xpose.msra.mxu0 0.0
    %74 = vmatprep.subr.mxu0 0.0
    %75 = vmatpush1.xpose.msra.mxu0 0.0
    %76 = vmatprep.subr.mxu0 0.0
    %77 = vmatpush1.xpose.msra.mxu0 0.0
    %78 = vmatprep.subr.mxu0 0.0
    %79 = vmatpush1.xpose.msra.mxu0 0.0
    %80 = vmatprep.subr.mxu0 0.0
    %81 = vmatpush1.xpose.msra.mxu0 0.0
    %82 = vmatprep.subr.mxu0 0.0
    %83 = vmatpush1.xpose.msra.mxu0 0.0
    %84 = vmatprep.subr.mxu0 0.0
    %85 = vmatpush1.xpose.msra.mxu0 0.0
    %86 = vmatprep.subr.mxu0 0.0
    %87 = vmatpush1.xpose.msra.mxu0 0.0
    %88 = vmatprep.subr.mxu0 0.0
    %89 = vmatpush1.xpose.msra.mxu0 0.0
    %90 = vmatprep.subr.mxu0 0.0
    %91 = vmatpush1.xpose.msra.mxu0 0.0
    %92 = vmatprep.subr.mxu0 0.0
    %93 = vmatpush1.xpose.msra.mxu0 0.0
    %94 = vmatprep.subr.mxu0 0.0
    %95 = vmatpush1.xpose.msra.mxu0 0.0
    %96 = vmatprep.subr.mxu0 0.0
    %97 = vmatpush1.xpose.msra.mxu0 0.0
    %98 = vmatprep.subr.mxu0 0.0
    %99 = vmatpush1.xpose.msra.mxu0 0.0
    %100 = vmatprep.subr.mxu0 0.0
    %101 = vmatpush1.xpose.msra.mxu0 0.0
    %102 = vmatprep.subr.mxu0 0.0
    %103 = vmatpush1.xpose.msra.mxu0 0.0
    %104 = vmatprep.subr.mxu0 0.0
    %105 = vmatpush1.xpose.msra.mxu0 0.0
    %106 = vmatprep.subr.mxu0 0.0
    %107 = vmatpush1.xpose.msra.mxu0 0.0
    %108 = vmatprep.subr.mxu0 0.0
    %109 = vmatpush1.xpose.msra.mxu0 0.0
    %110 = vmatprep.subr.mxu0 0.0
    %111 = vmatpush1.xpose.msra.mxu0 0.0
    %112 = vmatprep.subr.mxu0 0.0
    %113 = vmatpush1.xpose.msra.mxu0 0.0
    %114 = vmatprep.subr.mxu0 0.0
    %115 = vmatpush1.xpose.msra.mxu0 0.0
    %116 = vmatprep.mubr.f32.mxu0 %v37
    %117 = vmatmul.mubr.f32.gmra.mrb[0].mxu0 %v36
    %v118 = vpop.f32.mrb[0].mxu0
    %v119 = vadd.f32 1.0, %v118
    %v120 = vpop.f32.mrb[0].mxu0
    %121 = vdwg.mxu0
    %122 = vmatprep.subr.mxu0 %v47
    %123 = vmatpush1.xpose.msra.mxu0 %v46
    %124 = vmatprep.subr.mxu0 0.0
    %125 = vmatpush1.xpose.msra.mxu0 0.0
    %126 = vmatprep.subr.mxu0 0.0
    %127 = vmatpush1.xpose.msra.mxu0 0.0
    %128 = vmatprep.subr.mxu0 0.0
    %129 = vmatpush1.xpose.msra.mxu0 0.0
    %130 = vmatprep.subr.mxu0 0.0
    %131 = vmatpush1.xpose.msra.mxu0 0.0
    %132 = vmatprep.subr.mxu0 0.0
    %133 = vmatpush1.xpose.msra.mxu0 0.0
    %134 = vmatprep.subr.mxu0 0.0
    %135 = vmatpush1.xpose.msra.mxu0 0.0
    %136 = vmatprep.subr.mxu0 0.0
    %137 = vmatpush1.xpose.msra.mxu0 0.0
    %138 = vmatprep.subr.mxu0 0.0
    %139 = vmatpush1.xpose.msra.mxu0 0.0
    %140 = vmatprep.subr.mxu0 0.0
    %141 = vmatpush1.xpose.msra.mxu0 0.0
    %142 = vmatprep.subr.mxu0 0.0
    %143 = vmatpush1.xpose.msra.mxu0 0.0
    %144 = vmatprep.subr.mxu0 0.0
    %145 = vmatpush1.xpose.msra.mxu0 0.0
    %146 = vmatprep.subr.mxu0 0.0
    %147 = vmatpush1.xpose.msra.mxu0 0.0
    %148 = vmatprep.subr.mxu0 0.0
    %149 = vmatpush1.xpose.msra.mxu0 0.0
    %150 = vmatprep.subr.mxu0 0.0
    %151 = vmatpush1.xpose.msra.mxu0 0.0
    %152 = vmatprep.subr.mxu0 0.0
    %153 = vmatpush1.xpose.msra.mxu0 0.0
    %154 = vmatprep.subr.mxu0 0.0
    %155 = vmatpush1.xpose.msra.mxu0 0.0
    %156 = vmatprep.subr.mxu0 0.0
    %157 = vmatpush1.xpose.msra.mxu0 0.0
    %158 = vmatprep.subr.mxu0 0.0
    %159 = vmatpush1.xpose.msra.mxu0 0.0
    %160 = vmatprep.subr.mxu0 0.0
    %161 = vmatpush1.xpose.msra.mxu0 0.0
    %162 = vmatprep.subr.mxu0 0.0
    %163 = vmatpush1.xpose.msra.mxu0 0.0
    %164 = vmatprep.subr.mxu0 0.0
    %165 = vmatpush1.xpose.msra.mxu0 0.0
    %166 = vmatprep.subr.mxu0 0.0
    %167 = vmatpush1.xpose.msra.mxu0 0.0
    %168 = vmatprep.subr.mxu0 0.0
    %169 = vmatpush1.xpose.msra.mxu0 0.0
    %170 = vmatprep.subr.mxu0 0.0
    %171 = vmatpush1.xpose.msra.mxu0 0.0
    %172 = vmatprep.subr.mxu0 0.0
    %173 = vmatpush1.xpose.msra.mxu0 0.0
    %174 = vmatprep.subr.mxu0 0.0
    %175 = vmatpush1.xpose.msra.mxu0 0.0
    %176 = vmatprep.subr.mxu0 0.0
    %177 = vmatpush1.xpose.msra.mxu0 0.0
    %178 = vmatprep.subr.mxu0 0.0
    %179 = vmatpush1.xpose.msra.mxu0 0.0
    %180 = vmatprep.subr.mxu0 0.0
    %181 = vmatpush1.xpose.msra.mxu0 0.0
    %182 = vmatprep.subr.mxu0 0.0
    %183 = vmatpush1.xpose.msra.mxu0 0.0
    %184 = vmatprep.subr.mxu0 0.0
    %185 = vmatpush1.xpose.msra.mxu0 0.0
    %186 = vmatprep.mubr.f32.mxu0 %v39
    %187 = vmatmul.mubr.f32.gmra.mrb[0].mxu0 %v38
    %v188 = vpop.f32.mrb[0].mxu0
    %v189 = vadd.f32 %v119, %v188
    %v190 = vpop.f32.mrb[0].mxu0
    %191 = vdwg.mxu0
    %192 = vmatprep.subr.mxu0 %v49
    %193 = vmatpush1.xpose.msra.mxu0 %v48
    %194 = vmatprep.subr.mxu0 0.0
    %195 = vmatpush1.xpose.msra.mxu0 0.0
    %196 = vmatprep.subr.mxu0 0.0
    %197 = vmatpush1.xpose.msra.mxu0 0.0
    %198 = vmatprep.subr.mxu0 0.0
    %199 = vmatpush1.xpose.msra.mxu0 0.0
    %200 = vmatprep.subr.mxu0 0.0
    %201 = vmatpush1.xpose.msra.mxu0 0.0
    %202 = vmatprep.subr.mxu0 0.0
    %203 = vmatpush1.xpose.msra.mxu0 0.0
    %204 = vmatprep.subr.mxu0 0.0
    %205 = vmatpush1.xpose.msra.mxu0 0.0
    %206 = vmatprep.subr.mxu0 0.0
    %207 = vmatpush1.xpose.msra.mxu0 0.0
    %208 = vmatprep.subr.mxu0 0.0
    %209 = vmatpush1.xpose.msra.mxu0 0.0
    %210 = vmatprep.subr.mxu0 0.0
    %211 = vmatpush1.xpose.msra.mxu0 0.0
    %212 = vmatprep.subr.mxu0 0.0
    %213 = vmatpush1.xpose.msra.mxu0 0.0
    %214 = vmatprep.subr.mxu0 0.0
    %215 = vmatpush1.xpose.msra.mxu0 0.0
    %216 = vmatprep.subr.mxu0 0.0
    %217 = vmatpush1.xpose.msra.mxu0 0.0
    %218 = vmatprep.subr.mxu0 0.0
    %219 = vmatpush1.xpose.msra.mxu0 0.0
    %220 = vmatprep.subr.mxu0 0.0
    %221 = vmatpush1.xpose.msra.mxu0 0.0
    %222 = vmatprep.subr.mxu0 0.0
    %223 = vmatpush1.xpose.msra.mxu0 0.0
    %224 = vmatprep.subr.mxu0 0.0
    %225 = vmatpush1.xpose.msra.mxu0 0.0
    %226 = vmatprep.subr.mxu0 0.0
    %227 = vmatpush1.xpose.msra.mxu0 0.0
    %228 = vmatprep.subr.mxu0 0.0
    %229 = vmatpush1.xpose.msra.mxu0 0.0
    %230 = vmatprep.subr.mxu0 0.0
    %231 = vmatpush1.xpose.msra.mxu0 0.0
    %232 = vmatprep.subr.mxu0 0.0
    %233 = vmatpush1.xpose.msra.mxu0 0.0
    %234 = vmatprep.subr.mxu0 0.0
    %235 = vmatpush1.xpose.msra.mxu0 0.0
    %236 = vmatprep.subr.mxu0 0.0
    %237 = vmatpush1.xpose.msra.mxu0 0.0
    %238 = vmatprep.subr.mxu0 0.0
    %239 = vmatpush1.xpose.msra.mxu0 0.0
    %240 = vmatprep.subr.mxu0 0.0
    %241 = vmatpush1.xpose.msra.mxu0 0.0
    %242 = vmatprep.subr.mxu0 0.0
    %243 = vmatpush1.xpose.msra.mxu0 0.0
    %244 = vmatprep.subr.mxu0 0.0
    %245 = vmatpush1.xpose.msra.mxu0 0.0
    %246 = vmatprep.subr.mxu0 0.0
    %247 = vmatpush1.xpose.msra.mxu0 0.0
    %248 = vmatprep.subr.mxu0 0.0
    %249 = vmatpush1.xpose.msra.mxu0 0.0
    %250 = vmatprep.subr.mxu0 0.0
    %251 = vmatpush1.xpose.msra.mxu0 0.0
    %252 = vmatprep.subr.mxu0 0.0
    %253 = vmatpush1.xpose.msra.mxu0 0.0
    %254 = vmatprep.subr.mxu0 0.0
    %255 = vmatpush1.xpose.msra.mxu0 0.0
    %256 = vmatprep.mubr.f32.mxu0 %v41
    %257 = vmatmul.mubr.f32.gmra.mrb[0].mxu0 %v40
    %v258 = vpop.f32.mrb[0].mxu0
    %v259 = vadd.f32 %v189, %v258
    %v260 = vpop.f32.mrb[0].mxu0
    %261 = vdwg.mxu0
    %262 = vmatprep.subr.mxu0 %v51
    %263 = vmatpush1.xpose.msra.mxu0 %v50
    %264 = vmatprep.subr.mxu0 0.0
    %265 = vmatpush1.xpose.msra.mxu0 0.0
    %266 = vmatprep.subr.mxu0 0.0
    %267 = vmatpush1.xpose.msra.mxu0 0.0
    %268 = vmatprep.subr.mxu0 0.0
    %269 = vmatpush1.xpose.msra.mxu0 0.0
    %270 = vmatprep.subr.mxu0 0.0
    %271 = vmatpush1.xpose.msra.mxu0 0.0
    %272 = vmatprep.subr.mxu0 0.0
    %273 = vmatpush1.xpose.msra.mxu0 0.0
    %274 = vmatprep.subr.mxu0 0.0
    %275 = vmatpush1.xpose.msra.mxu0 0.0
    %276 = vmatprep.subr.mxu0 0.0
    %277 = vmatpush1.xpose.msra.mxu0 0.0
    %278 = vmatprep.subr.mxu0 0.0
    %279 = vmatpush1.xpose.msra.mxu0 0.0
    %280 = vmatprep.subr.mxu0 0.0
    %281 = vmatpush1.xpose.msra.mxu0 0.0
    %282 = vmatprep.subr.mxu0 0.0
    %283 = vmatpush1.xpose.msra.mxu0 0.0
    %284 = vmatprep.subr.mxu0 0.0
    %285 = vmatpush1.xpose.msra.mxu0 0.0
    %286 = vmatprep.subr.mxu0 0.0
    %287 = vmatpush1.xpose.msra.mxu0 0.0
    %288 = vmatprep.subr.mxu0 0.0
    %289 = vmatpush1.xpose.msra.mxu0 0.0
    %290 = vmatprep.subr.mxu0 0.0
    %291 = vmatpush1.xpose.msra.mxu0 0.0
    %292 = vmatprep.subr.mxu0 0.0
    %293 = vmatpush1.xpose.msra.mxu0 0.0
    %294 = vmatprep.subr.mxu0 0.0
    %295 = vmatpush1.xpose.msra.mxu0 0.0
    %296 = vmatprep.subr.mxu0 0.0
    %297 = vmatpush1.xpose.msra.mxu0 0.0
    %298 = vmatprep.subr.mxu0 0.0
    %299 = vmatpush1.xpose.msra.mxu0 0.0
    %300 = vmatprep.subr.mxu0 0.0
    %301 = vmatpush1.xpose.msra.mxu0 0.0
    %302 = vmatprep.subr.mxu0 0.0
    %303 = vmatpush1.xpose.msra.mxu0 0.0
    %304 = vmatprep.subr.mxu0 0.0
    %305 = vmatpush1.xpose.msra.mxu0 0.0
    %306 = vmatprep.subr.mxu0 0.0
    %307 = vmatpush1.xpose.msra.mxu0 0.0
    %308 = vmatprep.subr.mxu0 0.0
    %309 = vmatpush1.xpose.msra.mxu0 0.0
    %310 = vmatprep.subr.mxu0 0.0
    %311 = vmatpush1.xpose.msra.mxu0 0.0
    %312 = vmatprep.subr.mxu0 0.0
    %313 = vmatpush1.xpose.msra.mxu0 0.0
    %314 = vmatprep.subr.mxu0 0.0
    %315 = vmatpush1.xpose.msra.mxu0 0.0
    %316 = vmatprep.subr.mxu0 0.0
    %317 = vmatpush1.xpose.msra.mxu0 0.0
    %318 = vmatprep.subr.mxu0 0.0
    %319 = vmatpush1.xpose.msra.mxu0 0.0
    %320 = vmatprep.subr.mxu0 0.0
    %321 = vmatpush1.xpose.msra.mxu0 0.0
    %322 = vmatprep.subr.mxu0 0.0
    %323 = vmatpush1.xpose.msra.mxu0 0.0
    %324 = vmatprep.subr.mxu0 0.0
    %325 = vmatpush1.xpose.msra.mxu0 0.0
    %326 = vmatprep.mubr.f32.mxu0 %v43
    %327 = vmatmul.mubr.f32.gmra.mrb[0].mxu0 %v42
    %v328 = vpop.f32.mrb[0].mxu0
    %v329 = vadd.f32 %v259, %v328
    %v330 = vpop.f32.mrb[0].mxu0
    %331 = vdwg.mxu0
    %v332 = vmul.f32 %v329, %v329
    %vm333 = vcmask 64512
    %334 = vst.msk [vmem:[#allocation7] sm:$0xff] %vm333, %v332
    // Predicated region
    $region18: #{tpu_custom_call.1} parent=1 // pred_check
      _
    $region19: #{tpu_custom_call.1} parent=1 // pred_check_branch
      %336 = sbr.rel (0) target = $region21
    $region20: #{tpu_custom_call.1} parent=1 // pred_region
      %s338 = ssub.s32 128, 128
      %339 = vsyncadd [#allocation4], %s338
      %s341 = sshll.u32 [#allocation7], 4
      %s342 = int_to_ptr.vmem [resolvable:$true] %s341
      %344 = dma.vmem_to_hbm [thread:$0]  %s342, 128, %s2, [#allocation4]
    $region21: #{tpu_custom_call.1} parent=1 // pred_fallthru
      _
    // Predicated region
    $region22: #{tpu_custom_call.1} parent=1 // pred_check
      _
    $region23: #{tpu_custom_call.1} parent=1 // pred_check_branch
      %346 = sbr.rel (0) target = $region25
    $region24: #{tpu_custom_call.1} parent=1 // pred_region
      %347 = dma.done [#allocation4], 128
    $region25: #{tpu_custom_call.1} parent=1 // pred_fallthru
      _
    %348 = vsyncpa [#allocation3], 1
    %349 = vsyncpa [#allocation6], 1
    %350 = vsyncpa [#allocation4], 1

</llo_original>
